<compile_context>
chip_gen: v6e
topology: v6e:2x2x1
jax: 0.10.0
libtpu: 0.0.40
codegen_flags: <defaults>
</compile_context>

<pallas_src>
import math
import functools

import jax
import jax.numpy as jnp
from jax.experimental import pallas as pl
from jax.experimental.pallas import tpu as pltpu


# ----------------------------------------------------------------------------
# Tiling helpers
# ----------------------------------------------------------------------------
def _round_up(x, m):
    return ((x + m - 1) // m) * m


def _tile_and_pad(dim, target, align=128):
    """(tile, padded_dim): full dim if small, else an aligned divisor <= target,
    else `target` with zero padding. Never returns a whole large axis."""
    if dim <= target:
        return dim, dim
    t = (target // align) * align
    while t >= align:
        if dim % t == 0:
            return t, dim
        t -= align
    return target, _round_up(dim, target)


def _pick_seq_tile(dim, target):
    """Tile that divides the sequence dim (no padding): full dim if small,
    else the largest aligned divisor <= target."""
    if dim <= target:
        return dim
    for align in (128, 8):
        t = (target // align) * align
        while t >= align:
            if dim % t == 0:
                return t
            t -= align
    # TODO(synk): pad the sequence dim (with key-padding masking) instead.
    return dim


# ----------------------------------------------------------------------------
# Tiled linear projection: out = x @ w, with w pre-transposed to [K, N]
# ----------------------------------------------------------------------------
def _matmul_kernel(x_ref, w_ref, o_ref, acc_ref):
    @pl.when(pl.program_id(2) == 0)
    def _():
        acc_ref[...] = jnp.zeros(acc_ref.shape, acc_ref.dtype)

    acc_ref[...] += jnp.dot(
        x_ref[...], w_ref[...], preferred_element_type=jnp.float32
    )

    @pl.when(pl.program_id(2) == pl.num_programs(2) - 1)
    def _():
        o_ref[...] = acc_ref[...].astype(o_ref.dtype)


def pallas_linear(x2d, w_kn, *, tm=512, tn=512, tk=512, out_dtype=jnp.bfloat16):
    """x2d: [M, K] (bf16), w_kn: [K, N] (bf16, pre-transposed at init)."""
    M, K = x2d.shape
    K2, N = w_kn.shape
    assert K == K2

    tm, Mp = _tile_and_pad(M, tm)
    tn, Np = _tile_and_pad(N, tn)
    tk, Kp = _tile_and_pad(K, tk)

    if (Mp, Kp) != (M, K):
        x2d = jnp.pad(x2d, ((0, Mp - M), (0, Kp - K)))
    if (Kp, Np) != (K, N):
        w_kn = jnp.pad(w_kn, ((0, Kp - K), (0, Np - N)))

    grid = (Mp // tm, Np // tn, Kp // tk)
    out = pl.pallas_call(
        _matmul_kernel,
        out_shape=jax.ShapeDtypeStruct((Mp, Np), out_dtype),
        grid_spec=pltpu.PrefetchScalarGridSpec(
            num_scalar_prefetch=0,
            grid=grid,
            in_specs=[
                pl.BlockSpec((tm, tk), lambda i, j, k: (i, k)),
                pl.BlockSpec((tk, tn), lambda i, j, k: (k, j)),
            ],
            out_specs=pl.BlockSpec((tm, tn), lambda i, j, k: (i, j)),
            scratch_shapes=[pltpu.VMEM((tm, tn), jnp.float32)],
        ),
        compiler_params=pltpu.CompilerParams(
            dimension_semantics=("parallel", "parallel", "arbitrary"),
        ),
    )(x2d, w_kn)

    if (Mp, Np) != (M, N):
        out = out[:M, :N]
    return out


# ----------------------------------------------------------------------------
# RoPE helper (value-level, full-width result via a single concatenate)
# ----------------------------------------------------------------------------
def _apply_rope(x, cos, sin):
    # x: [..., D] f32, cos/sin broadcastable to x.
    half = x.shape[-1] // 2
    x1 = x[..., :half]
    x2 = x[..., half:]
    rot = jnp.concatenate([-x2, x1], axis=-1)
    return x * cos + rot * sin


# ----------------------------------------------------------------------------
# RoPE kernel for K (rotated K is also returned as the kv cache)
# ----------------------------------------------------------------------------
def _rope_k_kernel(k_ref, cos_ref, sin_ref, o_ref):
    k = k_ref[0, 0].astype(jnp.float32)          # [ts, D]
    out = _apply_rope(k, cos_ref[0], sin_ref[0])
    o_ref[0, 0] = out.astype(o_ref.dtype)        # one full-width store


def pallas_rope_k(k, cos, sin, *, ts_target=512):
    # k: [B, nKV, S, D], cos/sin: [B, S, D]
    B, nKV, S, D = k.shape
    ts = _pick_seq_tile(S, ts_target)
    grid = (B, nKV, S // ts)
    return pl.pallas_call(
        _rope_k_kernel,
        out_shape=jax.ShapeDtypeStruct((B, nKV, S, D), k.dtype),
        grid_spec=pltpu.PrefetchScalarGridSpec(
            num_scalar_prefetch=0,
            grid=grid,
            in_specs=[
                pl.BlockSpec((1, 1, ts, D), lambda b, h, s: (b, h, s, 0)),
                pl.BlockSpec((1, ts, D), lambda b, h, s: (b, s, 0)),
                pl.BlockSpec((1, ts, D), lambda b, h, s: (b, s, 0)),
            ],
            out_specs=pl.BlockSpec((1, 1, ts, D), lambda b, h, s: (b, h, s, 0)),
        ),
        compiler_params=pltpu.CompilerParams(
            dimension_semantics=("parallel", "parallel", "parallel"),
        ),
    )(k, cos, sin)


# ----------------------------------------------------------------------------
# GQA-grouped causal flash attention with fused Q-RoPE
# ----------------------------------------------------------------------------
def _flash_attn_kernel(q_ref, k_ref, v_ref, cos_ref, sin_ref, o_ref,
                       q_sc, m_sc, l_sc, acc_sc, *, scale, tq, tk, n_rep):
    qi = pl.program_id(2)
    ki = pl.program_id(3)
    D = q_ref.shape[-1]

    @pl.when(ki == 0)
    def _():
        # Fused RoPE + softmax scaling on the query tile (once per q tile).
        q = q_ref[0].astype(jnp.float32)                       # [n_rep, tq, D]
        q = _apply_rope(q, cos_ref[0][None], sin_ref[0][None]) * scale
        q_sc[...] = q.reshape(n_rep * tq, D).astype(q_sc.dtype)
        m_sc[...] = jnp.full(m_sc.shape, -jnp.inf, m_sc.dtype)
        l_sc[...] = jnp.zeros(l_sc.shape, l_sc.dtype)
        acc_sc[...] = jnp.zeros(acc_sc.shape, acc_sc.dtype)

    first_q = qi * tq
    last_q = first_q + tq - 1
    first_k = ki * tk
    last_k = first_k + tk - 1

    def online_softmax_step(apply_mask):
        # One K/V tile serves all n_rep query heads of this KV group.
        s = jax.lax.dot_general(
            q_sc[...], k_ref[0, 0],
            dimension_numbers=(((1,), (1,)), ((), ())),
            preferred_element_type=jnp.float32)                # [n_rep*tq, tk]
        if apply_mask:  # static: only diagonal-straddling tiles pay for masking
            row = first_q + jax.lax.broadcasted_iota(
                jnp.int32, (n_rep, tq, tk), 1).reshape(n_rep * tq, tk)
            col = first_k + jax.lax.broadcasted_iota(
                jnp.int32, (n_rep * tq, tk), 1)
            s = jnp.where(row >= col, s, jnp.float32(-1e30))
        m_prev = m_sc[...]
        m_new = jnp.maximum(m_prev, jnp.max(s, axis=-1, keepdims=True))
        alpha = jnp.exp(m_prev - m_new)
        p = jnp.exp(s - m_new)
        l_sc[...] = alpha * l_sc[...] + jnp.sum(p, axis=-1, keepdims=True)
        acc_sc[...] = alpha * acc_sc[...] + jax.lax.dot_general(
            p.astype(jnp.bfloat16), v_ref[0, 0],
            dimension_numbers=(((1,), (0,)), ((), ())),
            preferred_element_type=jnp.float32)
        m_sc[...] = m_new

    # Tile straddles the causal diagonal -> masked path.
    @pl.when(jnp.logical_and(first_k <= last_q, last_k > first_q))
    def _():
        online_softmax_step(apply_mask=True)

    # Tile is fully in the visible past -> mask-free path.
    @pl.when(last_k <= first_q)
    def _():
        online_softmax_step(apply_mask=False)

    @pl.when(ki == pl.num_programs(3) - 1)
    def _():
        inv_l = pl.reciprocal(l_sc[...], approx=True)
        o_ref[0] = (acc_sc[...] * inv_l).reshape(n_rep, tq, D).astype(o_ref.dtype)


def pallas_flash_attention(q, k, v, cos, sin, *, n_rep,
                           tq_target=256, tk_target=256):
    # q: [B, nH, S, D] (pre-RoPE), k: [B, nKV, S, D] (post-RoPE), v: [B, nKV, S, D]
    # cos/sin: [B, S, D]
    B, nH, S, D = q.shape
    nKV = k.shape[1]
    assert nH == nKV * n_rep
    scale = 1.0 / math.sqrt(D)

    tq = _pick_seq_tile(S, tq_target)
    tk = _pick_seq_tile(S, tk_target)
    grid = (B, nKV, S // tq, S // tk)

    def kv_index(b, g, qi, ki):
        # Causal clamp: fully-masked future KV tiles repeat the previous block
        # index so the pipeliner elides their HBM DMA.
        last_needed = (qi * tq + tq - 1) // tk
        return (b, g, jnp.minimum(ki, last_needed), 0)

    kernel = functools.partial(
        _flash_attn_kernel, scale=scale, tq=tq, tk=tk, n_rep=n_rep)

    return pl.pallas_call(
        kernel,
        out_shape=jax.ShapeDtypeStruct((B, nH, S, D), q.dtype),
        grid_spec=pltpu.PrefetchScalarGridSpec(
            num_scalar_prefetch=0,
            grid=grid,
            in_specs=[
                # All n_rep query heads of a KV group come in one block.
                pl.BlockSpec((1, n_rep, tq, D), lambda b, g, qi, ki: (b, g, qi, 0)),
                pl.BlockSpec((1, 1, tk, D), kv_index),
                pl.BlockSpec((1, 1, tk, D), kv_index),
                pl.BlockSpec((1, tq, D), lambda b, g, qi, ki: (b, qi, 0)),
                pl.BlockSpec((1, tq, D), lambda b, g, qi, ki: (b, qi, 0)),
            ],
            out_specs=pl.BlockSpec((1, n_rep, tq, D),
                                   lambda b, g, qi, ki: (b, g, qi, 0)),
            scratch_shapes=[
                pltpu.VMEM((n_rep * tq, D), jnp.bfloat16),   # rotated+scaled q
                pltpu.VMEM((n_rep * tq, 1), jnp.float32),    # running max m
                pltpu.VMEM((n_rep * tq, 1), jnp.float32),    # running sum l
                pltpu.VMEM((n_rep * tq, D), jnp.float32),    # output accumulator
            ],
        ),
        compiler_params=pltpu.CompilerParams(
            dimension_semantics=("parallel", "parallel", "parallel", "arbitrary"),
        ),
    )(q, k, v, cos, sin)


# ----------------------------------------------------------------------------
# Module-level wrapper (mirrors LlamaAttention.forward, pretraining_tp == 1)
# ----------------------------------------------------------------------------
class Config:
    hidden_size = 32
    num_attention_heads = 4
    num_kv_heads = 2
    max_position_embeddings = 64
    pretraining_tp = 1
    use_cache = True
    rope_base = 10000.0


def make_rope_cache(head_dim, max_pos, base, dtype=jnp.float32):
    inv_freq = 1.0 / (base ** (jnp.arange(0, head_dim, 2, dtype=dtype) / head_dim))
    t = jnp.arange(max_pos, dtype=dtype)
    freqs = jnp.einsum("i,j->ij", t, inv_freq)        # [max_pos, D/2]
    emb = jnp.concatenate([freqs, freqs], axis=-1)    # [max_pos, D]
    return jnp.cos(emb), jnp.sin(emb)


def prepare_weights(params):
    """One-time prep: fuse QKV, pre-transpose to [K, N], cast to bf16."""
    w_qkv = jnp.concatenate([params["wq"], params["wk"], params["wv"]], axis=0)
    return {
        "w_qkv_t": w_qkv.T.astype(jnp.bfloat16),      # [H, (nH + 2*nKV) * Dh]
        "wo_t": params["wo"].T.astype(jnp.bfloat16),  # [nH*Dh, H]
    }


def llama_attention_forward(prep, cfg, hidden_states, position_ids,
                            cos_cached, sin_cached):
    B, S, H = hidden_states.shape
    nH = cfg.num_attention_heads
    nKV = cfg.num_kv_heads
    Dh = H // nH
    n_rep = nH // nKV

    # bf16 activation path end-to-end (f32 accumulation stays inside kernels).
    x2d = hidden_states.reshape(B * S, H).astype(jnp.bfloat16)

    # Fused QKV projection: one tiled GEMM reads the activations once.
    qkv = pallas_linear(x2d, prep["w_qkv_t"])          # bf16 [B*S, (nH+2*nKV)*Dh]

    q = qkv[:, : nH * Dh].reshape(B, S, nH, Dh).transpose(0, 2, 1, 3)
    k = qkv[:, nH * Dh: (nH + nKV) * Dh].reshape(B, S, nKV, Dh).transpose(0, 2, 1, 3)
    v = qkv[:, (nH + nKV) * Dh:].reshape(B, S, nKV, Dh).transpose(0, 2, 1, 3)

    # RoPE angles for the given position_ids -> [B, S, Dh] (f32)
    cos = cos_cached[position_ids]
    sin = sin_cached[position_ids]

    # K gets RoPE in its own kernel (the rotated K is the kv cache anyway);
    # Q RoPE is fused into the attention kernel below.
    k = pallas_rope_k(k, cos, sin)

    past_key_value = (k, v) if cfg.use_cache else None

    # Causal flash attention; KV stays [B, nKV, S, Dh] (no repeat_kv copy) and
    # each K/V fetch is shared by the n_rep query heads of its group.
    attn_out = pallas_flash_attention(q, k, v, cos, sin, n_rep=n_rep)
    attn2d = attn_out.transpose(0, 2, 1, 3).reshape(B * S, nH * Dh)

    out = pallas_linear(attn2d, prep["wo_t"], out_dtype=jnp.float32)
    return out.reshape(B, S, H), past_key_value


# ----------------------------------------------------------------------------
# Pure-JAX reference (mirrors the PyTorch code path exactly, f32)
# ----------------------------------------------------------------------------
def repeat_kv(x, n_rep):
    if n_rep == 1:
        return x
    B, nKV, S, D = x.shape
    x = jnp.broadcast_to(x[:, :, None, :, :], (B, nKV, n_rep, S, D))
    return x.reshape(B, nKV * n_rep, S, D)


def reference_forward(params, cfg, hidden_states, attention_mask, position_ids,
                      cos_cached, sin_cached):
    B, S, H = hidden_states.shape
    nH = cfg.num_attention_heads
    nKV = cfg.num_kv_heads
    Dh = H // nH
    n_rep = nH // nKV

    q = (hidden_states @ params["wq"].T).reshape(B, S, nH, Dh).transpose(0, 2, 1, 3)
    k = (hidden_states @ params["wk"].T).reshape(B, S, nKV, Dh).transpose(0, 2, 1, 3)
    v = (hidden_states @ params["wv"].T).reshape(B, S, nKV, Dh).transpose(0, 2, 1, 3)

    cos = cos_cached[position_ids][:, None]  # [B, 1, S, Dh]
    sin = sin_cached[position_ids][:, None]

    def rot(x):
        h = x.shape[-1] // 2
        return jnp.concatenate([-x[..., h:], x[..., :h]], axis=-1)

    q = q * cos + rot(q) * sin
    k = k * cos + rot(k) * sin

    k_rep = repeat_kv(k, n_rep)
    v_rep = repeat_kv(v, n_rep)

    scores = jnp.einsum("bhqd,bhkd->bhqk", q, k_rep) / math.sqrt(Dh)
    scores = scores + attention_mask
    weights = jax.nn.softmax(scores, axis=-1)
    out = jnp.einsum("bhqk,bhkd->bhqd", weights, v_rep)
    out = out.transpose(0, 2, 1, 3).reshape(B, S, H)
    return out @ params["wo"].T


# ----------------------------------------------------------------------------
if __name__ == "__main__":
    cfg = Config()
    B, S = 2, 8
    H = cfg.hidden_size
    nH = cfg.num_attention_heads
    nKV = cfg.num_kv_heads
    Dh = H // nH

    key = jax.random.PRNGKey(0)
    kx, kq, kk, kv, ko = jax.random.split(key, 5)

    params = {
        "wq": jax.random.normal(kq, (nH * Dh, H), jnp.float32) * 0.05,
        "wk": jax.random.normal(kk, (nKV * Dh, H), jnp.float32) * 0.05,
        "wv": jax.random.normal(kv, (nKV * Dh, H), jnp.float32) * 0.05,
        "wo": jax.random.normal(ko, (H, nH * Dh), jnp.float32) * 0.05,
    }
    prep = prepare_weights(params)   # one-time fuse / transpose / bf16 cast

    hidden_states = jax.random.normal(kx, (B, S, H), jnp.float32)
    position_ids = jnp.broadcast_to(jnp.arange(S)[None, :], (B, S))

    cos_cached, sin_cached = make_rope_cache(
        Dh, cfg.max_position_embeddings, cfg.rope_base
    )

    out, past_kv = llama_attention_forward(
        prep, cfg, hidden_states, position_ids, cos_cached, sin_cached,
    )
    out = jax.block_until_ready(out)

    # Reference path: explicit additive causal mask (same semantics as the
    # in-kernel causal mask used by the Pallas attention kernel).
    causal = jnp.tril(jnp.ones((S, S), dtype=bool))
    attention_mask = jnp.where(causal, 0.0, -1e9).astype(jnp.float32)
    attention_mask = jnp.broadcast_to(attention_mask[None, None], (B, 1, S, S))

    ref = reference_forward(
        params, cfg, hidden_states, attention_mask, position_ids,
        cos_cached, sin_cached,
    )

    assert out.shape == (B, S, H)
    assert past_kv[0].shape == (B, nKV, S, Dh) and past_kv[1].shape == (B, nKV, S, Dh)
    assert jnp.allclose(out, ref, atol=2e-2, rtol=2e-2), (
        f"max abs diff {jnp.max(jnp.abs(out - ref))}"
    )

    print("KERNEL_OK")
</pallas_src>

<mosaic_0001>
module attributes {stable_mosaic.version = 11 : i64} {
  func.func @_matmul_kernel(%arg0: i32, %arg1: i32, %arg2: i32, %arg3: memref<16x32xbf16, #tpu.memory_space<vmem>>, %arg4: memref<32x64xbf16, #tpu.memory_space<vmem>>, %arg5: memref<16x64xbf16, #tpu.memory_space<vmem>>, %arg6: memref<16x64xf32, #tpu.memory_space<vmem>>) attributes {dimension_semantics = [#tpu.dimension_semantics<parallel>, #tpu.dimension_semantics<parallel>, #tpu.dimension_semantics<arbitrary>], iteration_bounds = array<i64: 1, 1, 1>, scalar_prefetch = 0 : i64, scratch_operands = 1 : i64, tpu.core_type = #tpu.core_type<tc>, window_params = [{transform_indices = @transform_0, window_bounds = array<i64: 16, 32>}, {transform_indices = @transform_1, window_bounds = array<i64: 32, 64>}, {transform_indices = @transform_2, window_bounds = array<i64: 16, 64>}]} {
    %c0_i32 = arith.constant 0 : i32
    %0 = arith.cmpi eq, %arg2, %c0_i32 : i32
    %1 = arith.extui %0 : i1 to i32
    %c0_i32_0 = arith.constant 0 : i32
    %2 = arith.cmpi ne, %1, %c0_i32_0 : i32
    scf.if %2 {
      %cst_10 = arith.constant 0.000000e+00 : f32
      %12 = vector.broadcast %cst_10 : f32 to vector<16x64xf32>
      %c0_11 = arith.constant 0 : index
      %c0_12 = arith.constant 0 : index
      %13 = vector.load %arg6[%c0_11, %c0_12] : memref<16x64xf32, #tpu.memory_space<vmem>>, vector<16x64xf32>
      tpu.vector_store %arg6[%c0_11, %c0_12], %12 {strides = array<i32>} : memref<16x64xf32, #tpu.memory_space<vmem>>, vector<16x64xf32>,
    } else {
    }
    %c0 = arith.constant 0 : index
    %c0_1 = arith.constant 0 : index
    %3 = vector.load %arg6[%c0, %c0_1] : memref<16x64xf32, #tpu.memory_space<vmem>>, vector<16x64xf32>
    %c0_2 = arith.constant 0 : index
    %c0_3 = arith.constant 0 : index
    %4 = vector.load %arg3[%c0_2, %c0_3] : memref<16x32xbf16, #tpu.memory_space<vmem>>, vector<16x32xbf16>
    %c0_4 = arith.constant 0 : index
    %c0_5 = arith.constant 0 : index
    %5 = vector.load %arg4[%c0_4, %c0_5] : memref<32x64xbf16, #tpu.memory_space<vmem>>, vector<32x64xbf16>
    %cst = arith.constant dense<0.000000e+00> : vector<16x64xf32>
    %6 = tpu.matmul %4, %5, %cst {dimension_numbers = #tpu.dot_dimension_numbers<[1], [0], [0], [1], [0, 0, 1, 1], [], []>} : vector<16x32xbf16>, vector<32x64xbf16>, vector<16x64xf32> -> vector<16x64xf32>
    %7 = arith.addf %3, %6 : vector<16x64xf32>
    %c0_6 = arith.constant 0 : index
    %c0_7 = arith.constant 0 : index
    %8 = vector.load %arg6[%c0_6, %c0_7] : memref<16x64xf32, #tpu.memory_space<vmem>>, vector<16x64xf32>
    tpu.vector_store %arg6[%c0_6, %c0_7], %7 {strides = array<i32>} : memref<16x64xf32, #tpu.memory_space<vmem>>, vector<16x64xf32>,
    %c0_i32_8 = arith.constant 0 : i32
    %9 = arith.cmpi eq, %arg2, %c0_i32_8 : i32
    %10 = arith.extui %9 : i1 to i32
    %c0_i32_9 = arith.constant 0 : i32
    %11 = arith.cmpi ne, %10, %c0_i32_9 : i32
    scf.if %11 {
      %c0_10 = arith.constant 0 : index
      %c0_11 = arith.constant 0 : index
      %12 = vector.load %arg6[%c0_10, %c0_11] : memref<16x64xf32, #tpu.memory_space<vmem>>, vector<16x64xf32>
      %13 = arith.truncf %12 : vector<16x64xf32> to vector<16x64xbf16>
      %c0_12 = arith.constant 0 : index
      %c0_13 = arith.constant 0 : index
      %14 = vector.load %arg5[%c0_12, %c0_13] : memref<16x64xbf16, #tpu.memory_space<vmem>>, vector<16x64xbf16>
      tpu.vector_store %arg5[%c0_12, %c0_13], %13 {strides = array<i32>} : memref<16x64xbf16, #tpu.memory_space<vmem>>, vector<16x64xbf16>,
    } else {
    }
    return
  }
  func.func @transform_0(%arg0: i32, %arg1: i32, %arg2: i32) -> (i32, i32) {
    %c0_i32 = arith.constant 0 : i32
    return %arg0, %arg2 : i32, i32
  }
  func.func @transform_1(%arg0: i32, %arg1: i32, %arg2: i32) -> (i32, i32) {
    %c0_i32 = arith.constant 0 : i32
    return %arg2, %arg1 : i32, i32
  }
  func.func @transform_2(%arg0: i32, %arg1: i32, %arg2: i32) -> (i32, i32) {
    %c0_i32 = arith.constant 0 : i32
    return %arg0, %arg1 : i32, i32
  }
}

</mosaic_0001>

<llo_original>
// kernel: tpu_custom_call.1
$region0: #{tpu_custom_call.1}
  #allocation0 [shape = 'u32[]', space=smem, size = 0x4, offset = 0x4, fixed_abs, tag = 'smem constant byte address 0x4 - core index']
  #allocation1 [shape = 'u32[144,128]{1,0:T(1,128)}', space=vmem, size = 0x12000, scoped, tag = 'internal scratch']
  #allocation2 [shape = 'f32[16,64]{1,0:T(8,128)}', space=vmem, size = 0x2000, scoped, tag = 'scratch operand']
  %s0 = inlined_call_operand.hbm [shape: bf16[16,32], index: 0, kind: input, shape index: {}]
  %s1 = inlined_call_operand.hbm [shape: bf16[32,64], index: 1, kind: input, shape index: {}]
  %s2 = inlined_call_operand.hbm [shape: bf16[16,64], index: 2, kind: output, shape index: {}]
  %s3 = sld [smem:[#allocation0]]
  $region34: #{tpu_custom_call.1} parent=0
    _
  %s5 = ssub.s32 1, %s3
  %s6 = scalar_select 0, %s5, %s3
  $region1: #{tpu_custom_call.1} parent=0
    #allocation3 [shape = 'u8[4096]{0}', space=vmem, size = 0x1000, scoped, tag = 'input window, operand 0, single buffered']
    #allocation4 [shape = 's32[1]{0}', space=sflag, size = 0x4, scoped, tag = 'scoped memory for tpu_custom_call.1']
    #allocation5 [shape = 's32[1]{0}', space=sflag, size = 0x4, scoped, tag = 'scoped memory for tpu_custom_call.1']
    #allocation6 [shape = 'u8[8192]{0}', space=vmem, size = 0x2000, scoped, tag = 'input window, operand 1, single buffered']
    #allocation7 [shape = 's32[1]{0}', space=sflag, size = 0x4, scoped, tag = 'scoped memory for tpu_custom_call.1']
    #allocation8 [shape = 'u8[4096]{0}', space=vmem, size = 0x1000, scoped, tag = 'output window, operand 0, single buffered']
    %7 = vsyncpa [#allocation4], 0
    %8 = vsyncpa [#allocation7], 0
    %9 = vsyncpa [#allocation5], 0
    // Predicated region
    $region2: #{tpu_custom_call.1} parent=1 // pred_check
      _
    $region3: #{tpu_custom_call.1} parent=1 // pred_check_branch
      %11 = sbr.rel (0) target = $region5
    $region4: #{tpu_custom_call.1} parent=1 // pred_region
      %s13 = ssub.s32 128, 128
      %14 = vsyncadd [#allocation4], %s13
      %s15 = sshll.u32 [#allocation3], 4
      %s16 = int_to_ptr.vmem [resolvable:$true] %s15
      %21 = dma.hbm_to_vmem [thread:$0]  %s0, 128, %s16, [#allocation4], 64, 64, 4
    $region5: #{tpu_custom_call.1} parent=1 // pred_fallthru
      _
    // Predicated region
    $region6: #{tpu_custom_call.1} parent=1 // pred_check
      _
    $region7: #{tpu_custom_call.1} parent=1 // pred_check_branch
      %23 = sbr.rel (0) target = $region9
    $region8: #{tpu_custom_call.1} parent=1 // pred_region
      %s25 = ssub.s32 256, 256
      %26 = vsyncadd [#allocation7], %s25
      %s27 = sshll.u32 [#allocation6], 4
      %s28 = int_to_ptr.vmem [resolvable:$true] %s27
      %33 = dma.hbm_to_vmem [thread:$0]  %s1, 256, %s28, [#allocation7], 64, 64, 4
    $region9: #{tpu_custom_call.1} parent=1 // pred_fallthru
      _
    // Predicated region
    $region10: #{tpu_custom_call.1} parent=1 // pred_check
      _
    $region11: #{tpu_custom_call.1} parent=1 // pred_check_branch
      %35 = sbr.rel (0) target = $region13
    $region12: #{tpu_custom_call.1} parent=1 // pred_region
      %36 = dma.done [#allocation4], 128
    $region13: #{tpu_custom_call.1} parent=1 // pred_fallthru
      _
    // Predicated region
    $region14: #{tpu_custom_call.1} parent=1 // pred_check
      _
    $region15: #{tpu_custom_call.1} parent=1 // pred_check_branch
      %38 = sbr.rel (0) target = $region17
    $region16: #{tpu_custom_call.1} parent=1 // pred_region
      %39 = dma.done [#allocation7], 256
    $region17: #{tpu_custom_call.1} parent=1 // pred_fallthru
      _
    %p41 = scmp.eq.s32.totalorder 0, 0
    // Predicated region
    $region18: #{tpu_custom_call.1} parent=1 // pred_check
      %p42 = pneg %p41
    $region19: #{tpu_custom_call.1} parent=1 // pred_check_branch
      %44 = sbr.rel (%p42) target = $region21
    $region20: #{tpu_custom_call.1} parent=1 // pred_region
      %vm45 = vcmask 523264
      %46 = vst.msk [vmem:[#allocation2] sm:$0xff] %vm45, 0.0
      %47 = vst.msk [vmem:[#allocation2 + $0x8] sm:$0xff] %vm45, 0.0
    $region21: #{tpu_custom_call.1} parent=1 // pred_fallthru
      _
    %v48 = vld [vmem:[#allocation2] sm:$0xff]
    %v49 = vld [vmem:[#allocation2 + $0x8] sm:$0xff]
    %v50 = vld [vmem:[#allocation3] sm:$0xf]
    %v51 = vld [vmem:[#allocation3 + $0x4] sm:$0xf]
    %v52 = vld [vmem:[#allocation6] sm:$0xf]
    %v53 = vld [vmem:[#allocation6 + $0x4] sm:$0xf]
    %v54 = vld [vmem:[#allocation6 + $0x8] sm:$0xf]
    %v55 = vld [vmem:[#allocation6 + $0xc] sm:$0xf]
    %v58 = vunpack.c.l.b16 %v50
    %v59 = vunpack.c.l.b16 %v51
    %v60 = vpack.c.b16 %v59, %v58
    %v65 = vunpack.c.l.b16 %v52
    %v66 = vunpack.c.l.b16 %v53
    %v67 = vunpack.c.l.b16 %v54
    %v68 = vunpack.c.l.b16 %v55
    %v69 = vpack.c.b16 %v66, %v65
    %v70 = vpack.c.b16 %v68, %v67
    %vm73 = vcmask 261120
    %v75 = vsel %vm73, %v60, 0
    %77 = vmatprep.subr.bf16.mxu0 0
    %78 = vmatpush1.bf16.msra.mxu0 0
    %79 = vmatprep.subr.bf16.mxu0 0
    %80 = vmatpush1.bf16.msra.mxu0 0
    %81 = vmatprep.subr.bf16.mxu0 0
    %82 = vmatpush1.bf16.msra.mxu0 0
    %83 = vmatprep.subr.bf16.mxu0 0
    %84 = vmatpush1.bf16.msra.mxu0 0
    %85 = vmatprep.subr.bf16.mxu0 0
    %86 = vmatpush1.bf16.msra.mxu0 0
    %87 = vmatprep.subr.bf16.mxu0 0
    %88 = vmatpush1.bf16.msra.mxu0 0
    %89 = vmatprep.subr.bf16.mxu0 0
    %90 = vmatpush1.bf16.msra.mxu0 %v70
    %91 = vmatprep.subr.bf16.mxu0 0
    %92 = vmatpush1.bf16.msra.mxu0 %v69
    %93 = vmatprep.subr.bf16.mxu0 0
    %94 = vmatpush2.bf16.msra.mxu0 0
    %95 = vmatprep.subr.bf16.mxu0 0
    %96 = vmatpush2.bf16.msra.mxu0 0
    %97 = vmatprep.subr.bf16.mxu0 0
    %98 = vmatpush2.bf16.msra.mxu0 0
    %99 = vmatprep.subr.bf16.mxu0 0
    %100 = vmatpush2.bf16.msra.mxu0 0
    %101 = vmatprep.subr.bf16.mxu0 0
    %102 = vmatpush2.bf16.msra.mxu0 0
    %103 = vmatprep.subr.bf16.mxu0 0
    %104 = vmatpush2.bf16.msra.mxu0 0
    %105 = vmatprep.subr.bf16.mxu0 0
    %106 = vmatpush2.bf16.msra.mxu0 0
    %107 = vmatprep.subr.bf16.mxu0 0
    %108 = vmatpush2.bf16.msra.mxu0 0
    %109 = vmatprep.mubr.bf16.mxu0 0
    %110 = vmatmul.mubr.bf16.gmra.mxu0 %v75
    %v111 = vpop.f32.mrf.mxu0
    %v112 = vadd.f32 0.0, %v111
    %v113 = vpop.f32.mrf.mxu0
    %v114 = vpop.f32.mrf.mxu0
    %v115 = vadd.f32 0.0, %v114
    %v116 = vpop.f32.mrf.mxu0
    %117 = vdwg.mxu0
    %v118 = vadd.f32 %v48, %v112
    %v119 = vadd.f32 %v49, %v115
    %vm120 = vcmask 523264
    %121 = vst.msk [vmem:[#allocation2] sm:$0xff] %vm120, %v118
    %122 = vst.msk [vmem:[#allocation2 + $0x8] sm:$0xff] %vm120, %v119
    // Predicated region
    $region22: #{tpu_custom_call.1} parent=1 // pred_check
      %p123 = pneg %p41
    $region23: #{tpu_custom_call.1} parent=1 // pred_check_branch
      %125 = sbr.rel (%p123) target = $region25
    $region24: #{tpu_custom_call.1} parent=1 // pred_region
      %v126 = vld [vmem:[#allocation2] sm:$0xff]
      %v127 = vld [vmem:[#allocation2 + $0x8] sm:$0xff]
      %v128 = vpack.c.bf16 %v127, %v126
      %v130 = vunpack.c.l.b16 %v128
      %v131 = vunpack.c.h.b16 %v128
      %v132 = vpack.c.b16 %v130, %v130
      %v133 = vpack.c.b16 %v131, %v131
      %vm136 = vcmask 519168
      %137 = vst.msk [vmem:[#allocation8] sm:$0xf] %vm136, %v132
      %138 = vst.msk [vmem:[#allocation8 + $0x4] sm:$0xf] %vm136, %v133
    $region25: #{tpu_custom_call.1} parent=1 // pred_fallthru
      _
    // Predicated region
    $region26: #{tpu_custom_call.1} parent=1 // pred_check
      _
    $region27: #{tpu_custom_call.1} parent=1 // pred_check_branch
      %140 = sbr.rel (0) target = $region29
    $region28: #{tpu_custom_call.1} parent=1 // pred_region
      %s142 = ssub.s32 128, 128
      %143 = vsyncadd [#allocation5], %s142
      %s144 = sshll.u32 [#allocation8], 4
      %s145 = int_to_ptr.vmem [resolvable:$true] %s144
      %150 = dma.vmem_to_hbm [thread:$0]  %s145, 128, %s2, [#allocation5], 64, 64, 4
    $region29: #{tpu_custom_call.1} parent=1 // pred_fallthru
      _
    // Predicated region
    $region30: #{tpu_custom_call.1} parent=1 // pred_check
      _
    $region31: #{tpu_custom_call.1} parent=1 // pred_check_branch
      %152 = sbr.rel (0) target = $region33
    $region32: #{tpu_custom_call.1} parent=1 // pred_region
      %153 = dma.done [#allocation5], 128
    $region33: #{tpu_custom_call.1} parent=1 // pred_fallthru
      _
    %154 = vsyncpa [#allocation4], 1
    %155 = vsyncpa [#allocation7], 1
    %156 = vsyncpa [#allocation5], 1

</llo_original>
